<compile_context>
chip_gen: v5e
topology: v5e:2x2
jax: 0.10.0
libtpu: 0.0.40
codegen_flags: <defaults>
</compile_context>

<pallas_src>
import functools

import jax
import jax.numpy as jnp
from jax.experimental import pallas as pl
from jax.experimental.pallas import tpu as pltpu


def _round_up(x, m):
    return (x + m - 1) // m * m


def _elup1(x):
    # torch: exp(x).where(x < 0, x + 1).  Clamp the exp input so the discarded
    # branch never produces inf for large positive x.
    return jnp.where(x < 0.0, jnp.exp(jnp.minimum(x, 0.0)), x + 1.0)


def _var_activation(log_var, name):
    if name == "exp":
        return jnp.exp(log_var)
    elif name == "relu":
        return jnp.maximum(log_var, jnp.zeros_like(log_var))
    elif name == "square":
        return jnp.square(log_var)
    elif name == "abs":
        return jnp.abs(log_var)
    elif name == "elup1":
        return _elup1(log_var)
    else:
        raise Exception("Variance activation function unknown.")


def _mask_store(y, out_ref, out_dim, act):
    # Columns [0, out_dim)          -> mean (identity)
    # Columns [out_dim, 2*out_dim)  -> var  (activation)
    # Remaining padded columns      -> garbage (sliced away in the wrapper)
    col = jax.lax.broadcasted_iota(jnp.int32, y.shape, 1)
    out_ref[...] = jnp.where(col >= out_dim, _var_activation(y, act), y
                             ).astype(out_ref.dtype)


# ----- fused-branch kernel (hidden % 128 != 0): 4 MXU dispatches -----------
def _kernel_fused(lm_ref, lc_ref, w1m_ref, w1v_ref, b1_ref, w2_ref, b2_ref,
                  wo_ref, bo_ref, out_ref, *, act, out_dim, cdt):
    lm = lm_ref[...].astype(cdt)
    lc = lc_ref[...].astype(cdt)
    h = (jnp.dot(lm, w1m_ref[...], preferred_element_type=jnp.float32)
         + jnp.dot(lc, w1v_ref[...], preferred_element_type=jnp.float32))
    h = jnp.maximum(h + b1_ref[...], 0.0).astype(cdt)
    h = jnp.dot(h, w2_ref[...], preferred_element_type=jnp.float32)
    h = jnp.maximum(h + b2_ref[...], 0.0).astype(cdt)
    y = jnp.dot(h, wo_ref[...], preferred_element_type=jnp.float32) + bo_ref[...]
    _mask_store(y, out_ref, out_dim, act)


# ----- split-branch kernel (hidden % 128 == 0): 6 lane-aligned dots --------
def _kernel_split(lm_ref, lc_ref,
                  wm1_ref, bm1_ref, wm2_ref, bm2_ref, wmo_ref,
                  wv1_ref, bv1_ref, wv2_ref, bv2_ref, wvo_ref, bo_ref,
                  out_ref, *, act, out_dim, cdt):
    lm = lm_ref[...].astype(cdt)
    lc = lc_ref[...].astype(cdt)
    hm = jnp.maximum(
        jnp.dot(lm, wm1_ref[...], preferred_element_type=jnp.float32)
        + bm1_ref[...], 0.0).astype(cdt)
    hm = jnp.maximum(
        jnp.dot(hm, wm2_ref[...], preferred_element_type=jnp.float32)
        + bm2_ref[...], 0.0).astype(cdt)
    hv = jnp.maximum(
        jnp.dot(lc, wv1_ref[...], preferred_element_type=jnp.float32)
        + bv1_ref[...], 0.0).astype(cdt)
    hv = jnp.maximum(
        jnp.dot(hv, wv2_ref[...], preferred_element_type=jnp.float32)
        + bv2_ref[...], 0.0).astype(cdt)
    y = (jnp.dot(hm, wmo_ref[...], preferred_element_type=jnp.float32)
         + jnp.dot(hv, wvo_ref[...], preferred_element_type=jnp.float32)
         + bo_ref[...])
    _mask_store(y, out_ref, out_dim, act)


def _pack_fused(p, lod, hidden, out_dim, n_out_pad, cdt):
    """Block-diagonal packing with layer-1 split into per-input row halves."""
    H = hidden
    f32 = jnp.float32
    w1m = jnp.zeros((lod, 2 * H), f32).at[:, :H].set(p["wm1"])
    w1v = jnp.zeros((lod, 2 * H), f32).at[:, H:].set(p["wv1"])
    b1 = jnp.concatenate([p["bm1"], p["bv1"]], axis=1)
    w2 = jnp.zeros((2 * H, 2 * H), f32)
    w2 = w2.at[:H, :H].set(p["wm2"]).at[H:, H:].set(p["wv2"])
    b2 = jnp.concatenate([p["bm2"], p["bv2"]], axis=1)
    wo = jnp.zeros((2 * H, n_out_pad), f32)
    wo = wo.at[:H, :out_dim].set(p["wmo"]).at[H:, out_dim:2 * out_dim].set(p["wvo"])
    bo = jnp.zeros((1, n_out_pad), f32)
    bo = bo.at[:, :out_dim].set(p["bmo"]).at[:, out_dim:2 * out_dim].set(p["bvo"])
    # Biases stay f32 (added to the f32 accumulator).
    return (w1m.astype(cdt), w1v.astype(cdt), b1,
            w2.astype(cdt), b2, wo.astype(cdt), bo)


def _pack_split(p, lod, hidden, out_dim, n_out_pad, cdt):
    """Fully separate branches; only the output layer is lane-padded."""
    f32 = jnp.float32
    wmo = jnp.zeros((hidden, n_out_pad), f32).at[:, :out_dim].set(p["wmo"])
    wvo = jnp.zeros((hidden, n_out_pad), f32).at[:, out_dim:2 * out_dim].set(p["wvo"])
    bo = jnp.zeros((1, n_out_pad), f32)
    bo = bo.at[:, :out_dim].set(p["bmo"]).at[:, out_dim:2 * out_dim].set(p["bvo"])
    return (p["wm1"].astype(cdt), p["bm1"], p["wm2"].astype(cdt), p["bm2"],
            wmo.astype(cdt),
            p["wv1"].astype(cdt), p["bv1"], p["wv2"].astype(cdt), p["bv2"],
            wvo.astype(cdt), bo)


def split_diag_gaussian_decoder(latent_mean, latent_cov, params,
                                dec_var_activation="elup1",
                                block_b=1024, compute_dtype=jnp.bfloat16):
    """Full decoder forward in one Pallas call, pipelined over the batch.

    latent_mean, latent_cov : [B, lod] float32
    params : dict of per-branch weights [in, out] and biases [1, out] (f32)
    returns (mean, var), each [B, out_dim] float32.
    """
    B, lod = latent_mean.shape
    hidden = params["wm1"].shape[1]
    out_dim = params["wmo"].shape[1]
    n_out_pad = _round_up(2 * out_dim, 128)   # lane-dense output slab
    cdt = jnp.dtype(compute_dtype)

    # Batch tile: multiple of 8 sublanes, large enough to amortize per-step
    # overhead, capped at ceil(B/2) so the grid has >= 2 steps when possible
    # (lets "parallel" shard the batch axis across both v7x TensorCores).
    half = _round_up(max(1, -(-B // 2)), 8)
    tb = max(8, min(block_b, half))
    grid_b = pl.cdiv(B, tb)                    # ragged last block is masked

    split_mid = (hidden % 128 == 0)
    if split_mid:
        ws = _pack_split(params, lod, hidden, out_dim, n_out_pad, cdt)
        kernel = functools.partial(_kernel_split, act=dec_var_activation,
                                   out_dim=out_dim, cdt=cdt)
        macs_per_row = 2 * lod * hidden + 2 * hidden * hidden + 2 * hidden * n_out_pad
    else:
        ws = _pack_fused(params, lod, hidden, out_dim, n_out_pad, cdt)
        kernel = functools.partial(_kernel_fused, act=dec_var_activation,
                                   out_dim=out_dim, cdt=cdt)
        macs_per_row = (2 * lod * (2 * hidden) + (2 * hidden) * (2 * hidden)
                        + (2 * hidden) * n_out_pad)

    flops = 2 * B * macs_per_row
    transcendentals = B * n_out_pad if dec_var_activation in ("exp", "elup1") else 0
    bytes_accessed = (latent_mean.size * latent_mean.dtype.itemsize
                      + latent_cov.size * latent_cov.dtype.itemsize
                      + sum(int(w.size) * w.dtype.itemsize for w in ws)
                      + B * n_out_pad * 4)

    act_spec = pl.BlockSpec((tb, lod), lambda i: (i, 0))
    in_specs = [act_spec, act_spec] + [
        pl.BlockSpec(w.shape, lambda i: (0, 0)) for w in ws   # VMEM-resident
    ]

    out = pl.pallas_call(
        kernel,
        out_shape=jax.ShapeDtypeStruct((B, n_out_pad), jnp.float32),
        grid_spec=pltpu.PrefetchScalarGridSpec(
            num_scalar_prefetch=0,
            grid=(grid_b,),
            in_specs=in_specs,
            out_specs=pl.BlockSpec((tb, n_out_pad), lambda i: (i, 0)),
        ),
        compiler_params=pltpu.CompilerParams(
            dimension_semantics=("parallel",)),
        cost_estimate=pl.CostEstimate(flops=flops,
                                      transcendentals=transcendentals,
                                      bytes_accessed=bytes_accessed),
    )(latent_mean, latent_cov, *ws)

    mean = out[:, :out_dim]
    var = out[:, out_dim:2 * out_dim]
    return mean, var


def init_params(key, lod, hidden, out_dim):
    """Deterministic parameter init (synthetic, not a checkpoint load)."""
    ks = jax.random.split(key, 12)

    def lin(kw, kb, fan_in, fan_out):
        bound = 1.0 / jnp.sqrt(fan_in)
        w = jax.random.uniform(kw, (fan_in, fan_out), jnp.float32, -bound, bound)
        b = jax.random.uniform(kb, (1, fan_out), jnp.float32, -bound, bound)
        return w, b

    p = {}
    p["wm1"], p["bm1"] = lin(ks[0], ks[1], lod, hidden)
    p["wm2"], p["bm2"] = lin(ks[2], ks[3], hidden, hidden)
    p["wmo"], p["bmo"] = lin(ks[4], ks[5], hidden, out_dim)
    p["wv1"], p["bv1"] = lin(ks[6], ks[7], lod, hidden)
    p["wv2"], p["bv2"] = lin(ks[8], ks[9], hidden, hidden)
    p["wvo"], p["bvo"] = lin(ks[10], ks[11], hidden, out_dim)
    return p


def _reference(latent_mean, latent_cov, p, act):
    h = jnp.maximum(latent_mean @ p["wm1"] + p["bm1"], 0.0)
    h = jnp.maximum(h @ p["wm2"] + p["bm2"], 0.0)
    mean = h @ p["wmo"] + p["bmo"]
    g = jnp.maximum(latent_cov @ p["wv1"] + p["bv1"], 0.0)
    g = jnp.maximum(g @ p["wv2"] + p["bv2"], 0.0)
    log_var = g @ p["wvo"] + p["bvo"]
    return mean, _var_activation(log_var, act)


def _check(mean, var, ref_mean, ref_var, tol, tag):
    assert mean.shape == ref_mean.shape and var.shape == ref_var.shape, tag
    assert jnp.allclose(mean, ref_mean, atol=tol, rtol=tol), tag
    assert jnp.allclose(var, ref_var, atol=tol, rtol=tol), tag


if __name__ == "__main__":
    # ---- small config, fused-branch path (hidden % 128 != 0) -------------
    B, lod, hidden, out_dim = 8, 32, 32, 16
    key = jax.random.PRNGKey(0)
    k_lm, k_lc, k_p = jax.random.split(key, 3)
    latent_mean = jax.random.normal(k_lm, (B, lod), jnp.float32)
    latent_cov = jax.random.uniform(k_lc, (B, lod), jnp.float32, 0.1, 1.0)
    params = init_params(k_p, lod, hidden, out_dim)

    # All variance activations, f32 compute (tight tolerance vs. reference).
    for act in ("elup1", "exp", "relu", "square", "abs"):
        mean, var = split_diag_gaussian_decoder(
            latent_mean, latent_cov, params, act, compute_dtype=jnp.float32)
        jax.block_until_ready((mean, var))
        ref_mean, ref_var = _reference(latent_mean, latent_cov, params, act)
        _check(mean, var, ref_mean, ref_var, 1e-4, "f32-" + act)
        if act == "elup1":
            assert bool(jnp.all(var > 0.0))          # elup1 strictly positive

    # bf16 MXU operands (default), loose tolerance.
    mean_b, var_b = split_diag_gaussian_decoder(latent_mean, latent_cov,
                                                params, "elup1")
    jax.block_until_ready((mean_b, var_b))
    ref_mean, ref_var = _reference(latent_mean, latent_cov, params, "elup1")
    _check(mean_b, var_b, ref_mean, ref_var, 5e-2, "bf16-elup1")

    # ---- ragged multi-step batch grid (no padding, masked last block) ----
    B2 = 300
    k2m, k2c = jax.random.split(jax.random.PRNGKey(1))
    lm2 = jax.random.normal(k2m, (B2, lod), jnp.float32)
    lc2 = jax.random.uniform(k2c, (B2, lod), jnp.float32, 0.1, 1.0)
    mean2, var2 = split_diag_gaussian_decoder(lm2, lc2, params, "elup1",
                                              block_b=128)   # grid = 3 steps
    jax.block_until_ready((mean2, var2))
    ref_mean2, ref_var2 = _reference(lm2, lc2, params, "elup1")
    _check(mean2, var2, ref_mean2, ref_var2, 5e-2, "bf16-ragged")

    # ---- hidden % 128 == 0: fully split (un-fused) branch path -----------
    B3, hidden3 = 64, 128
    k3m, k3c, k3p = jax.random.split(jax.random.PRNGKey(2), 3)
    lm3 = jax.random.normal(k3m, (B3, lod), jnp.float32)
    lc3 = jax.random.uniform(k3c, (B3, lod), jnp.float32, 0.1, 1.0)
    params3 = init_params(k3p, lod, hidden3, out_dim)
    mean3, var3 = split_diag_gaussian_decoder(
        lm3, lc3, params3, "elup1", compute_dtype=jnp.float32)
    jax.block_until_ready((mean3, var3))
    ref_mean3, ref_var3 = _reference(lm3, lc3, params3, "elup1")
    _check(mean3, var3, ref_mean3, ref_var3, 1e-4, "f32-split-elup1")
    mean3b, var3b = split_diag_gaussian_decoder(lm3, lc3, params3, "elup1")
    jax.block_until_ready((mean3b, var3b))
    _check(mean3b, var3b, ref_mean3, ref_var3, 5e-2, "bf16-split-elup1")

    print("KERNEL_OK")
</pallas_src>

<mosaic_0001>
module attributes {stable_mosaic.version = 11 : i64} {
  func.func @_kernel_fused(%arg0: i32, %arg1: memref<8x32xf32, #tpu.memory_space<vmem>>, %arg2: memref<8x32xf32, #tpu.memory_space<vmem>>, %arg3: memref<32x64xf32, #tpu.memory_space<vmem>>, %arg4: memref<32x64xf32, #tpu.memory_space<vmem>>, %arg5: memref<1x64xf32, #tpu.memory_space<vmem>>, %arg6: memref<64x64xf32, #tpu.memory_space<vmem>>, %arg7: memref<1x64xf32, #tpu.memory_space<vmem>>, %arg8: memref<64x128xf32, #tpu.memory_space<vmem>>, %arg9: memref<1x128xf32, #tpu.memory_space<vmem>>, %arg10: memref<8x128xf32, #tpu.memory_space<vmem>>) attributes {dimension_semantics = [#tpu.dimension_semantics<parallel>], iteration_bounds = array<i64: 1>, scalar_prefetch = 0 : i64, scratch_operands = 0 : i64, tpu.core_type = #tpu.core_type<tc>, window_params = [{transform_indices = @transform_0, window_bounds = array<i64: 8, 32>}, {transform_indices = @transform_1, window_bounds = array<i64: 8, 32>}, {pipeline_mode = #tpu.pipeline_mode<synchronous>, transform_indices = @transform_2, window_bounds = array<i64: 32, 64>}, {pipeline_mode = #tpu.pipeline_mode<synchronous>, transform_indices = @transform_3, window_bounds = array<i64: 32, 64>}, {pipeline_mode = #tpu.pipeline_mode<synchronous>, transform_indices = @transform_4, window_bounds = array<i64: 1, 64>}, {pipeline_mode = #tpu.pipeline_mode<synchronous>, transform_indices = @transform_5, window_bounds = array<i64: 64, 64>}, {pipeline_mode = #tpu.pipeline_mode<synchronous>, transform_indices = @transform_6, window_bounds = array<i64: 1, 64>}, {pipeline_mode = #tpu.pipeline_mode<synchronous>, transform_indices = @transform_7, window_bounds = array<i64: 64, 128>}, {pipeline_mode = #tpu.pipeline_mode<synchronous>, transform_indices = @transform_8, window_bounds = array<i64: 1, 128>}, {transform_indices = @transform_9, window_bounds = array<i64: 8, 128>}]} {
    %c0 = arith.constant 0 : index
    %c0_0 = arith.constant 0 : index
    %0 = vector.load %arg1[%c0, %c0_0] : memref<8x32xf32, #tpu.memory_space<vmem>>, vector<8x32xf32>
    %c0_1 = arith.constant 0 : index
    %c0_2 = arith.constant 0 : index
    %1 = vector.load %arg2[%c0_1, %c0_2] : memref<8x32xf32, #tpu.memory_space<vmem>>, vector<8x32xf32>
    %c0_3 = arith.constant 0 : index
    %c0_4 = arith.constant 0 : index
    %2 = vector.load %arg3[%c0_3, %c0_4] : memref<32x64xf32, #tpu.memory_space<vmem>>, vector<32x64xf32>
    %cst = arith.constant dense<0.000000e+00> : vector<8x64xf32>
    %3 = tpu.matmul %0, %2, %cst {dimension_numbers = #tpu.dot_dimension_numbers<[1], [0], [0], [1], [0, 0, 1, 1], [], []>} : vector<8x32xf32>, vector<32x64xf32>, vector<8x64xf32> -> vector<8x64xf32>
    %c0_5 = arith.constant 0 : index
    %c0_6 = arith.constant 0 : index
    %4 = vector.load %arg4[%c0_5, %c0_6] : memref<32x64xf32, #tpu.memory_space<vmem>>, vector<32x64xf32>
    %cst_7 = arith.constant dense<0.000000e+00> : vector<8x64xf32>
    %5 = tpu.matmul %1, %4, %cst_7 {dimension_numbers = #tpu.dot_dimension_numbers<[1], [0], [0], [1], [0, 0, 1, 1], [], []>} : vector<8x32xf32>, vector<32x64xf32>, vector<8x64xf32> -> vector<8x64xf32>
    %6 = arith.addf %3, %5 : vector<8x64xf32>
    %c0_8 = arith.constant 0 : index
    %c0_9 = arith.constant 0 : index
    %7 = vector.load %arg5[%c0_8, %c0_9] : memref<1x64xf32, #tpu.memory_space<vmem>>, vector<1x64xf32>
    %8 = vector.broadcast %7 : vector<1x64xf32> to vector<8x64xf32>
    %9 = arith.addf %6, %8 : vector<8x64xf32>
    %cst_10 = arith.constant 0.000000e+00 : f32
    %10 = vector.broadcast %cst_10 : f32 to vector<8x64xf32>
    %11 = arith.maximumf %9, %10 : vector<8x64xf32>
    %c0_11 = arith.constant 0 : index
    %c0_12 = arith.constant 0 : index
    %12 = vector.load %arg6[%c0_11, %c0_12] : memref<64x64xf32, #tpu.memory_space<vmem>>, vector<64x64xf32>
    %cst_13 = arith.constant dense<0.000000e+00> : vector<8x64xf32>
    %13 = tpu.matmul %11, %12, %cst_13 {dimension_numbers = #tpu.dot_dimension_numbers<[1], [0], [0], [1], [0, 0, 1, 1], [], []>} : vector<8x64xf32>, vector<64x64xf32>, vector<8x64xf32> -> vector<8x64xf32>
    %c0_14 = arith.constant 0 : index
    %c0_15 = arith.constant 0 : index
    %14 = vector.load %arg7[%c0_14, %c0_15] : memref<1x64xf32, #tpu.memory_space<vmem>>, vector<1x64xf32>
    %15 = vector.broadcast %14 : vector<1x64xf32> to vector<8x64xf32>
    %16 = arith.addf %13, %15 : vector<8x64xf32>
    %cst_16 = arith.constant 0.000000e+00 : f32
    %17 = vector.broadcast %cst_16 : f32 to vector<8x64xf32>
    %18 = arith.maximumf %16, %17 : vector<8x64xf32>
    %c0_17 = arith.constant 0 : index
    %c0_18 = arith.constant 0 : index
    %19 = vector.load %arg8[%c0_17, %c0_18] : memref<64x128xf32, #tpu.memory_space<vmem>>, vector<64x128xf32>
    %cst_19 = arith.constant dense<0.000000e+00> : vector<8x128xf32>
    %20 = tpu.matmul %18, %19, %cst_19 {dimension_numbers = #tpu.dot_dimension_numbers<[1], [0], [0], [1], [0, 0, 1, 1], [], []>} : vector<8x64xf32>, vector<64x128xf32>, vector<8x128xf32> -> vector<8x128xf32>
    %c0_20 = arith.constant 0 : index
    %c0_21 = arith.constant 0 : index
    %21 = vector.load %arg9[%c0_20, %c0_21] : memref<1x128xf32, #tpu.memory_space<vmem>>, vector<1x128xf32>
    %22 = vector.broadcast %21 : vector<1x128xf32> to vector<8x128xf32>
    %23 = arith.addf %20, %22 : vector<8x128xf32>
    %24 = tpu.iota {dimensions = array<i32: 1>} : vector<8x128xi32>
    %c16_i32 = arith.constant 16 : i32
    %25 = vector.broadcast %c16_i32 : i32 to vector<8x128xi32>
    %26 = arith.cmpi sge, %24, %25 : vector<8x128xi32>
    %cst_22 = arith.constant 0.000000e+00 : f32
    %27 = vector.broadcast %cst_22 : f32 to vector<8x128xf32>
    %28 = arith.cmpf olt, %23, %27 : vector<8x128xf32>
    %cst_23 = arith.constant 0.000000e+00 : f32
    %29 = vector.broadcast %cst_23 : f32 to vector<8x128xf32>
    %30 = arith.minimumf %23, %29 : vector<8x128xf32>
    %31 = math.exp %30 : vector<8x128xf32>
    %cst_24 = arith.constant 1.000000e+00 : f32
    %32 = vector.broadcast %cst_24 : f32 to vector<8x128xf32>
    %33 = arith.addf %23, %32 : vector<8x128xf32>
    %34 = arith.select %28, %31, %33 : vector<8x128xi1>, vector<8x128xf32>
    %35 = arith.select %26, %34, %23 : vector<8x128xi1>, vector<8x128xf32>
    %c0_25 = arith.constant 0 : index
    %c0_26 = arith.constant 0 : index
    %36 = vector.load %arg10[%c0_25, %c0_26] : memref<8x128xf32, #tpu.memory_space<vmem>>, vector<8x128xf32>
    tpu.vector_store %arg10[%c0_25, %c0_26], %35 {strides = array<i32>} : memref<8x128xf32, #tpu.memory_space<vmem>>, vector<8x128xf32>,
    return
  }
  func.func @transform_0(%arg0: i32) -> (i32, i32) {
    %c0_i32 = arith.constant 0 : i32
    %c0_i32_0 = arith.constant 0 : i32
    return %arg0, %c0_i32 : i32, i32
  }
  func.func @transform_1(%arg0: i32) -> (i32, i32) {
    %c0_i32 = arith.constant 0 : i32
    %c0_i32_0 = arith.constant 0 : i32
    return %arg0, %c0_i32 : i32, i32
  }
  func.func @transform_2(%arg0: i32) -> (i32, i32) {
    %c0_i32 = arith.constant 0 : i32
    %c0_i32_0 = arith.constant 0 : i32
    %c0_i32_1 = arith.constant 0 : i32
    return %c0_i32, %c0_i32_0 : i32, i32
  }
  func.func @transform_3(%arg0: i32) -> (i32, i32) {
    %c0_i32 = arith.constant 0 : i32
    %c0_i32_0 = arith.constant 0 : i32
    %c0_i32_1 = arith.constant 0 : i32
    return %c0_i32, %c0_i32_0 : i32, i32
  }
  func.func @transform_4(%arg0: i32) -> (i32, i32) {
    %c0_i32 = arith.constant 0 : i32
    %c0_i32_0 = arith.constant 0 : i32
    %c0_i32_1 = arith.constant 0 : i32
    return %c0_i32, %c0_i32_0 : i32, i32
  }
  func.func @transform_5(%arg0: i32) -> (i32, i32) {
    %c0_i32 = arith.constant 0 : i32
    %c0_i32_0 = arith.constant 0 : i32
    %c0_i32_1 = arith.constant 0 : i32
    return %c0_i32, %c0_i32_0 : i32, i32
  }
  func.func @transform_6(%arg0: i32) -> (i32, i32) {
    %c0_i32 = arith.constant 0 : i32
    %c0_i32_0 = arith.constant 0 : i32
    %c0_i32_1 = arith.constant 0 : i32
    return %c0_i32, %c0_i32_0 : i32, i32
  }
  func.func @transform_7(%arg0: i32) -> (i32, i32) {
    %c0_i32 = arith.constant 0 : i32
    %c0_i32_0 = arith.constant 0 : i32
    %c0_i32_1 = arith.constant 0 : i32
    return %c0_i32, %c0_i32_0 : i32, i32
  }
  func.func @transform_8(%arg0: i32) -> (i32, i32) {
    %c0_i32 = arith.constant 0 : i32
    %c0_i32_0 = arith.constant 0 : i32
    %c0_i32_1 = arith.constant 0 : i32
    return %c0_i32, %c0_i32_0 : i32, i32
  }
  func.func @transform_9(%arg0: i32) -> (i32, i32) {
    %c0_i32 = arith.constant 0 : i32
    %c0_i32_0 = arith.constant 0 : i32
    return %arg0, %c0_i32 : i32, i32
  }
}

</mosaic_0001>

<llo_original>
// kernel: tpu_custom_call.1
$region0: #{tpu_custom_call.1}
  #allocation0 [shape = 'u32[]', space=smem, size = 0x4, offset = 0x4, fixed_abs, tag = 'smem constant byte address 0x4 - core index']
  #allocation1 [shape = 'u32[72,128]{1,0:T(1,128)}', space=vmem, size = 0x9000, scoped, tag = 'internal scratch']
  %s0 = inlined_call_operand.hbm [shape: f32[8,32], index: 0, kind: input, shape index: {}]
  %s1 = inlined_call_operand.hbm [shape: f32[8,32], index: 1, kind: input, shape index: {}]
  %s2 = inlined_call_operand.hbm [shape: f32[32,64], index: 2, kind: input, shape index: {}]
  %s3 = inlined_call_operand.hbm [shape: f32[32,64], index: 3, kind: input, shape index: {}]
  %s4 = inlined_call_operand.vmem [shape: f32[1,64], index: 4, kind: input, shape index: {}]
  %s5 = inlined_call_operand.hbm [shape: f32[64,64], index: 5, kind: input, shape index: {}]
  %s6 = inlined_call_operand.vmem [shape: f32[1,64], index: 6, kind: input, shape index: {}]
  %s7 = inlined_call_operand.hbm [shape: f32[64,128], index: 7, kind: input, shape index: {}]
  %s8 = inlined_call_operand.vmem [shape: f32[1,128], index: 8, kind: input, shape index: {}]
  %s9 = inlined_call_operand.hbm [shape: f32[8,128], index: 9, kind: output, shape index: {}]
  %s10 = sld [smem:[#allocation0]]
  $region70: #{tpu_custom_call.1} parent=0
    _
  %s12 = ssub.s32 1, %s10
  %s13 = scalar_select 0, %s12, %s10
  $region1: #{tpu_custom_call.1} parent=0
    #allocation2 [shape = 'u8[4096]{0}', space=vmem, size = 0x1000, scoped, tag = 'input window, operand 0, single buffered']
    #allocation3 [shape = 's32[1]{0}', space=sflag, size = 0x4, scoped, tag = 'scoped memory for tpu_custom_call.1']
    #allocation4 [shape = 's32[1]{0}', space=sflag, size = 0x4, scoped, tag = 'scoped memory for tpu_custom_call.1']
    #allocation5 [shape = 'u8[4096]{0}', space=vmem, size = 0x1000, scoped, tag = 'input window, operand 1, single buffered']
    #allocation6 [shape = 's32[1]{0}', space=sflag, size = 0x4, scoped, tag = 'scoped memory for tpu_custom_call.1']
    #allocation7 [shape = 'u8[16384]{0}', space=vmem, size = 0x4000, scoped, tag = 'input window, operand 2, single buffered']
    #allocation8 [shape = 'u8[16384]{0}', space=vmem, size = 0x4000, scoped, tag = 'input window, operand 3, single buffered']
    #allocation9 [shape = 's32[1]{0}', space=sflag, size = 0x4, scoped, tag = 'scoped memory for tpu_custom_call.1']
    #allocation10 [shape = 'u8[32768]{0}', space=vmem, size = 0x8000, scoped, tag = 'input window, operand 5, single buffered']
    #allocation11 [shape = 'u8[32768]{0}', space=vmem, size = 0x8000, scoped, tag = 'input window, operand 7, single buffered']
    #allocation12 [shape = 's32[1]{0}', space=sflag, size = 0x4, scoped, tag = 'scoped memory for tpu_custom_call.1']
    #allocation13 [shape = 'u8[4096]{0}', space=vmem, size = 0x1000, scoped, tag = 'output window, operand 0, single buffered']
    %14 = vsyncpa [#allocation3], 0
    %15 = vsyncpa [#allocation6], 0
    %16 = vsyncpa [#allocation9], 0
    %17 = vsyncpa [#allocation12], 0
    %18 = vsyncpa [#allocation4], 0
    // Predicated region
    $region2: #{tpu_custom_call.1} parent=1 // pred_check
      _
    $region3: #{tpu_custom_call.1} parent=1 // pred_check_branch
      %20 = sbr.rel (0) target = $region5
    $region4: #{tpu_custom_call.1} parent=1 // pred_region
      %22 = vsyncadd [#allocation3], 0
      %s24 = sshll.u32 %s0, 4
      %s25 = int_to_ptr.hbm [resolvable:$true] %s24
      %s26 = sshll.u32 [#allocation2], 4
      %s27 = int_to_ptr.vmem [resolvable:$true] %s26
      %29 = dma.hbm_to_vmem [thread:$0]  %s25, 128, %s27, [#allocation3]
    $region5: #{tpu_custom_call.1} parent=1 // pred_fallthru
      _
    // Predicated region
    $region6: #{tpu_custom_call.1} parent=1 // pred_check
      _
    $region7: #{tpu_custom_call.1} parent=1 // pred_check_branch
      %31 = sbr.rel (0) target = $region9
    $region8: #{tpu_custom_call.1} parent=1 // pred_region
      %33 = vsyncadd [#allocation6], 0
      %s35 = sshll.u32 %s1, 4
      %s36 = int_to_ptr.hbm [resolvable:$true] %s35
      %s37 = sshll.u32 [#allocation5], 4
      %s38 = int_to_ptr.vmem [resolvable:$true] %s37
      %40 = dma.hbm_to_vmem [thread:$0]  %s36, 128, %s38, [#allocation6]
    $region9: #{tpu_custom_call.1} parent=1 // pred_fallthru
      _
    // Predicated region
    $region10: #{tpu_custom_call.1} parent=1 // pred_check
      _
    $region11: #{tpu_custom_call.1} parent=1 // pred_check_branch
      %42 = sbr.rel (0) target = $region13
    $region12: #{tpu_custom_call.1} parent=1 // pred_region
      %44 = vsyncadd [#allocation6], 0
      %s45 = sshll.u32 %s2, 4
      %s46 = int_to_ptr.hbm [resolvable:$true] %s45
      %s47 = sshll.u32 [#allocation7], 4
      %s48 = int_to_ptr.vmem [resolvable:$true] %s47
      %53 = dma.hbm_to_vmem [thread:$0]  %s46, 512, %s48, [#allocation6], 128, 128, 8
    $region13: #{tpu_custom_call.1} parent=1 // pred_fallthru
      _
    // Predicated region
    $region14: #{tpu_custom_call.1} parent=1 // pred_check
      _
    $region15: #{tpu_custom_call.1} parent=1 // pred_check_branch
      %55 = sbr.rel (0) target = $region17
    $region16: #{tpu_custom_call.1} parent=1 // pred_region
      %57 = vsyncadd [#allocation9], 0
      %s58 = sshll.u32 %s3, 4
      %s59 = int_to_ptr.hbm [resolvable:$true] %s58
      %s60 = sshll.u32 [#allocation8], 4
      %s61 = int_to_ptr.vmem [resolvable:$true] %s60
      %66 = dma.hbm_to_vmem [thread:$0]  %s59, 512, %s61, [#allocation9], 128, 128, 8
    $region17: #{tpu_custom_call.1} parent=1 // pred_fallthru
      _
    // Predicated region
    $region18: #{tpu_custom_call.1} parent=1 // pred_check
      _
    $region19: #{tpu_custom_call.1} parent=1 // pred_check_branch
      %68 = sbr.rel (0) target = $region21
    $region20: #{tpu_custom_call.1} parent=1 // pred_region
      _
    $region21: #{tpu_custom_call.1} parent=1 // pred_fallthru
      _
    // Predicated region
    $region22: #{tpu_custom_call.1} parent=1 // pred_check
      _
    $region23: #{tpu_custom_call.1} parent=1 // pred_check_branch
      %70 = sbr.rel (0) target = $region25
    $region24: #{tpu_custom_call.1} parent=1 // pred_region
      %72 = vsyncadd [#allocation9], 0
      %s73 = sshll.u32 %s5, 4
      %s74 = int_to_ptr.hbm [resolvable:$true] %s73
      %s75 = sshll.u32 [#allocation10], 4
      %s76 = int_to_ptr.vmem [resolvable:$true] %s75
      %81 = dma.hbm_to_vmem [thread:$0]  %s74, 1024, %s76, [#allocation9], 128, 128, 8
    $region25: #{tpu_custom_call.1} parent=1 // pred_fallthru
      _
    // Predicated region
    $region26: #{tpu_custom_call.1} parent=1 // pred_check
      _
    $region27: #{tpu_custom_call.1} parent=1 // pred_check_branch
      %83 = sbr.rel (0) target = $region29
    $region28: #{tpu_custom_call.1} parent=1 // pred_region
      _
    $region29: #{tpu_custom_call.1} parent=1 // pred_fallthru
      _
    // Predicated region
    $region30: #{tpu_custom_call.1} parent=1 // pred_check
      _
    $region31: #{tpu_custom_call.1} parent=1 // pred_check_branch
      %85 = sbr.rel (0) target = $region33
    $region32: #{tpu_custom_call.1} parent=1 // pred_region
      %87 = vsyncadd [#allocation12], 0
      %s88 = sshll.u32 %s7, 4
      %s89 = int_to_ptr.hbm [resolvable:$true] %s88
      %s90 = sshll.u32 [#allocation11], 4
      %s91 = int_to_ptr.vmem [resolvable:$true] %s90
      %96 = dma.hbm_to_vmem [thread:$0]  %s89, 1024, %s91, [#allocation12], 128, 128, 8
    $region33: #{tpu_custom_call.1} parent=1 // pred_fallthru
      _
    // Predicated region
    $region34: #{tpu_custom_call.1} parent=1 // pred_check
      _
    $region35: #{tpu_custom_call.1} parent=1 // pred_check_branch
      %98 = sbr.rel (0) target = $region37
    $region36: #{tpu_custom_call.1} parent=1 // pred_region
      _
    $region37: #{tpu_custom_call.1} parent=1 // pred_fallthru
      _
    // Predicated region
    $region38: #{tpu_custom_call.1} parent=1 // pred_check
      _
    $region39: #{tpu_custom_call.1} parent=1 // pred_check_branch
      %100 = sbr.rel (0) target = $region41
    $region40: #{tpu_custom_call.1} parent=1 // pred_region
      %102 = dma.done [#allocation3], 128
    $region41: #{tpu_custom_call.1} parent=1 // pred_fallthru
      _
    // Predicated region
    $region42: #{tpu_custom_call.1} parent=1 // pred_check
      _
    $region43: #{tpu_custom_call.1} parent=1 // pred_check_branch
      %104 = sbr.rel (0) target = $region45
    $region44: #{tpu_custom_call.1} parent=1 // pred_region
      %106 = dma.done [#allocation6], 128
    $region45: #{tpu_custom_call.1} parent=1 // pred_fallthru
      _
    // Predicated region
    $region46: #{tpu_custom_call.1} parent=1 // pred_check
      _
    $region47: #{tpu_custom_call.1} parent=1 // pred_check_branch
      %108 = sbr.rel (0) target = $region49
    $region48: #{tpu_custom_call.1} parent=1 // pred_region
      %110 = dma.done [#allocation6], 512
    $region49: #{tpu_custom_call.1} parent=1 // pred_fallthru
      _
    // Predicated region
    $region50: #{tpu_custom_call.1} parent=1 // pred_check
      _
    $region51: #{tpu_custom_call.1} parent=1 // pred_check_branch
      %112 = sbr.rel (0) target = $region53
    $region52: #{tpu_custom_call.1} parent=1 // pred_region
      %114 = dma.done [#allocation9], 512
    $region53: #{tpu_custom_call.1} parent=1 // pred_fallthru
      _
    // Predicated region
    $region54: #{tpu_custom_call.1} parent=1 // pred_check
      _
    $region55: #{tpu_custom_call.1} parent=1 // pred_check_branch
      %116 = sbr.rel (0) target = $region57
    $region56: #{tpu_custom_call.1} parent=1 // pred_region
      %118 = dma.done [#allocation9], 1024
    $region57: #{tpu_custom_call.1} parent=1 // pred_fallthru
      _
    // Predicated region
    $region58: #{tpu_custom_call.1} parent=1 // pred_check
      _
    $region59: #{tpu_custom_call.1} parent=1 // pred_check_branch
      %120 = sbr.rel (0) target = $region61
    $region60: #{tpu_custom_call.1} parent=1 // pred_region
      %122 = dma.done [#allocation12], 1024
    $region61: #{tpu_custom_call.1} parent=1 // pred_fallthru
      _
    %v123 = vld [vmem:[#allocation2] sm:$0xff]
    %v124 = vld [vmem:[#allocation5] sm:$0xff]
    %v125 = vld [vmem:[#allocation7] sm:$0xff]
    %v126 = vld [vmem:[#allocation7 + $0x8] sm:$0xff]
    %v127 = vld [vmem:[#allocation7 + $0x10] sm:$0xff]
    %v128 = vld [vmem:[#allocation7 + $0x18] sm:$0xff]
    %v129 = vld [vmem:[#allocation8] sm:$0xff]
    %v130 = vld [vmem:[#allocation8 + $0x8] sm:$0xff]
    %v131 = vld [vmem:[#allocation8 + $0x10] sm:$0xff]
    %v132 = vld [vmem:[#allocation8 + $0x18] sm:$0xff]
    %vm133 = vcmask 261120
    %v135 = vsel %vm133, %v124, 0
    %137 = vmatpush.msra.mxu0 0.0
    %138 = vmatpush.msra.mxu0 0.0
    %139 = vmatpush.msra.mxu0 0.0
    %140 = vmatpush.msra.mxu0 0.0
    %141 = vmatpush.msra.mxu0 0.0
    %142 = vmatpush.msra.mxu0 0.0
    %143 = vmatpush.msra.mxu0 0.0
    %144 = vmatpush.msra.mxu0 0.0
    %145 = vmatpush.msra.mxu0 0.0
    %146 = vmatpush.msra.mxu0 0.0
    %147 = vmatpush.msra.mxu0 0.0
    %148 = vmatpush.msra.mxu0 0.0
    %149 = vmatpush.msra.mxu0 %v132
    %150 = vmatpush.msra.mxu0 %v131
    %151 = vmatpush.msra.mxu0 %v130
    %152 = vmatpush.msra.mxu0 %v129
    %153 = vmatmul.f32.gmra.mxu0 %v135
    %v154 = vpop.f32.mrf.mxu0
    %v155 = vadd.f32 0.0, %v154
    %156 = vdwg.mxu0
    %v158 = vsel %vm133, %v123, 0
    %160 = vmatpush.msra.mxu0 0.0
    %161 = vmatpush.msra.mxu0 0.0
    %162 = vmatpush.msra.mxu0 0.0
    %163 = vmatpush.msra.mxu0 0.0
    %164 = vmatpush.msra.mxu0 0.0
    %165 = vmatpush.msra.mxu0 0.0
    %166 = vmatpush.msra.mxu0 0.0
    %167 = vmatpush.msra.mxu0 0.0
    %168 = vmatpush.msra.mxu0 0.0
    %169 = vmatpush.msra.mxu0 0.0
    %170 = vmatpush.msra.mxu0 0.0
    %171 = vmatpush.msra.mxu0 0.0
    %172 = vmatpush.msra.mxu0 %v128
    %173 = vmatpush.msra.mxu0 %v127
    %174 = vmatpush.msra.mxu0 %v126
    %175 = vmatpush.msra.mxu0 %v125
    %176 = vmatmul.f32.gmra.mxu0 %v158
    %v177 = vpop.f32.mrf.mxu0
    %v178 = vadd.f32 %v155, %v177
    %179 = vdwg.mxu0
    %v180 = vld [vmem:[%s4] sm:$0x1]
    %v182 = vperm.slane %v180, 0
    %v184 = vadd.f32 %v178, %v182
    %v185 = vmax.f32 %v184, 0.0
    %v186 = vld [vmem:[#allocation10] sm:$0xff]
    %v187 = vld [vmem:[#allocation10 + $0x8] sm:$0xff]
    %v188 = vld [vmem:[#allocation10 + $0x10] sm:$0xff]
    %v189 = vld [vmem:[#allocation10 + $0x18] sm:$0xff]
    %v190 = vld [vmem:[#allocation10 + $0x20] sm:$0xff]
    %v191 = vld [vmem:[#allocation10 + $0x28] sm:$0xff]
    %v192 = vld [vmem:[#allocation10 + $0x30] sm:$0xff]
    %v193 = vld [vmem:[#allocation10 + $0x38] sm:$0xff]
    %v194 = vld [vmem:[%s6] sm:$0x1]
    %v196 = vperm.slane %v194, 0
    %vm198 = vcmask 523264
    %v200 = vsel %vm198, %v185, 0
    %202 = vmatpush.msra.mxu0 0.0
    %203 = vmatpush.msra.mxu0 0.0
    %204 = vmatpush.msra.mxu0 0.0
    %205 = vmatpush.msra.mxu0 0.0
    %206 = vmatpush.msra.mxu0 0.0
    %207 = vmatpush.msra.mxu0 0.0
    %208 = vmatpush.msra.mxu0 0.0
    %209 = vmatpush.msra.mxu0 0.0
    %210 = vmatpush.msra.mxu0 %v193
    %211 = vmatpush.msra.mxu0 %v192
    %212 = vmatpush.msra.mxu0 %v191
    %213 = vmatpush.msra.mxu0 %v190
    %214 = vmatpush.msra.mxu0 %v189
    %215 = vmatpush.msra.mxu0 %v188
    %216 = vmatpush.msra.mxu0 %v187
    %217 = vmatpush.msra.mxu0 %v186
    %218 = vmatmul.f32.gmra.mxu0 %v200
    %v219 = vpop.f32.mrf.mxu0
    %v220 = vadd.f32 %v196, %v219
    %221 = vdwg.mxu0
    %v222 = vmax.f32 %v220, 0.0
    %v223 = vld [vmem:[#allocation11] sm:$0xff]
    %v224 = vld [vmem:[#allocation11 + $0x8] sm:$0xff]
    %v225 = vld [vmem:[#allocation11 + $0x10] sm:$0xff]
    %v226 = vld [vmem:[#allocation11 + $0x18] sm:$0xff]
    %v227 = vld [vmem:[#allocation11 + $0x20] sm:$0xff]
    %v228 = vld [vmem:[#allocation11 + $0x28] sm:$0xff]
    %v229 = vld [vmem:[#allocation11 + $0x30] sm:$0xff]
    %v230 = vld [vmem:[#allocation11 + $0x38] sm:$0xff]
    %v231 = vld [vmem:[%s8] sm:$0x1]
    %v233 = vperm.slane %v231, 0
    %v236 = vsel %vm198, %v222, 0
    %238 = vmatpush.msra.mxu0 0.0
    %239 = vmatpush.msra.mxu0 0.0
    %240 = vmatpush.msra.mxu0 0.0
    %241 = vmatpush.msra.mxu0 0.0
    %242 = vmatpush.msra.mxu0 0.0
    %243 = vmatpush.msra.mxu0 0.0
    %244 = vmatpush.msra.mxu0 0.0
    %245 = vmatpush.msra.mxu0 0.0
    %246 = vmatpush.msra.mxu0 %v230
    %247 = vmatpush.msra.mxu0 %v229
    %248 = vmatpush.msra.mxu0 %v228
    %249 = vmatpush.msra.mxu0 %v227
    %250 = vmatpush.msra.mxu0 %v226
    %251 = vmatpush.msra.mxu0 %v225
    %252 = vmatpush.msra.mxu0 %v224
    %253 = vmatpush.msra.mxu0 %v223
    %254 = vmatmul.f32.gmra.mxu0 %v236
    %v255 = vpop.f32.mrf.mxu0
    %v256 = vadd.f32 %v233, %v255
    %257 = vdwg.mxu0
    %v258 = vlaneseq
    %v259 = vand.u32 %v258, 127
    %vm260 = vcmp.ge.s32.totalorder %v259, 16
    %vm261 = vcmp.lt.f32.partialorder %v256, 0.0
    %v262 = vmin.f32 %v256, 0.0
    %v263 = vmul.f32 %v262, 1.442695
    %v264 = vpow.pop %v263
    %v265 = vadd.f32 %v256, 1.0
    %v266 = vsel %vm261, %v264, %v265
    %v267 = vsel %vm260, %v266, %v256
    %268 = vst [vmem:[#allocation13] sm:$0xff] %v267
    // Predicated region
    $region62: #{tpu_custom_call.1} parent=1 // pred_check
      _
    $region63: #{tpu_custom_call.1} parent=1 // pred_check_branch
      %270 = sbr.rel (0) target = $region65
    $region64: #{tpu_custom_call.1} parent=1 // pred_region
      %272 = vsyncadd [#allocation4], 0
      %s274 = sshll.u32 [#allocation13], 4
      %s275 = int_to_ptr.vmem [resolvable:$true] %s274
      %s276 = sshll.u32 %s9, 4
      %s277 = int_to_ptr.hbm [resolvable:$true] %s276
      %279 = dma.vmem_to_hbm [thread:$0]  %s275, 128, %s277, [#allocation4]
    $region65: #{tpu_custom_call.1} parent=1 // pred_fallthru
      _
    // Predicated region
    $region66: #{tpu_custom_call.1} parent=1 // pred_check
      _
    $region67: #{tpu_custom_call.1} parent=1 // pred_check_branch
      %281 = sbr.rel (0) target = $region69
    $region68: #{tpu_custom_call.1} parent=1 // pred_region
      %283 = dma.done [#allocation4], 128
    $region69: #{tpu_custom_call.1} parent=1 // pred_fallthru
      _
    %284 = vsyncpa [#allocation3], 1
    %285 = vsyncpa [#allocation6], 1
    %286 = vsyncpa [#allocation9], 1
    %287 = vsyncpa [#allocation12], 1
    %288 = vsyncpa [#allocation4], 1

</llo_original>
